<compile_context>
chip_gen: v6e
topology: v6e:2x2x1
jax: 0.10.0
libtpu: 0.0.40
codegen_flags: <defaults>
</compile_context>

<pallas_src>
import jax
import jax.numpy as jnp
from jax.experimental import pallas as pl
from jax.experimental.pallas import tpu as pltpu


def _module0_kernel(seed_ref, param_ref, out_ref):
    # seed_ref : SMEM (1,) int32
    # param_ref: VMEM (5, 5) (any float dtype; cast in-kernel)
    # out_ref  : VMEM (5, 5) float32
    H, W = out_ref.shape

    # --- one full vreg of counter-based random bits: tile-friendly (8, 128) ---
    row = jax.lax.broadcasted_iota(jnp.int32, (8, 128), 0)
    col = jax.lax.broadcasted_iota(jnp.int32, (8, 128), 1)
    ctr = (row << 7) | col                       # unique per-element counter, 0..1023

    seed = seed_ref[0]                           # int32 scalar from SMEM
    mixed = ctr ^ (seed * jnp.int32(-1640531527))  # seed * 0x9E3779B9 (wrapping)

    # murmur3 fmix32 finalizer (stateless counter PRNG), done in uint32 so >> is logical.
    x = jax.lax.bitcast_convert_type(mixed, jnp.uint32)
    x = x ^ (x >> 16)
    x = x * jnp.uint32(0x85EBCA6B)
    x = x ^ (x >> 13)
    x = x * jnp.uint32(0xC2B2AE35)
    x = x ^ (x >> 16)

    # --- top-left HxW bits -> U[0,1) via the mantissa bit-trick ---
    bits = x[:H, :W]
    mant = (bits & jnp.uint32(0x007FFFFF)) | jnp.uint32(0x3F800000)
    u = jax.lax.bitcast_convert_type(mant, jnp.float32) - jnp.float32(1.0)

    # parameter0 + noise, all 2-D, cast done in-kernel.
    out_ref[...] = param_ref[...].astype(jnp.float32) + u

    # Note: torch.nn.functional.dropout(x1) in the reference forward is dead code —
    # its value never reaches the output (rand_like only uses x1's shape/dtype).


def module0_forward(x1, parameter0, seed: int):
    """Pallas implementation of Module0.forward: parameter0 + U[0,1) noise of x1's shape."""
    assert x1.ndim == 3 and x1.shape[0] == 1 and x1.shape[1:] == parameter0.shape
    H, W = parameter0.shape
    seed_arr = jnp.asarray([seed], dtype=jnp.int32)

    out2d = pl.pallas_call(
        _module0_kernel,
        out_shape=jax.ShapeDtypeStruct((H, W), jnp.float32),
        in_specs=[
            pl.BlockSpec(memory_space=pltpu.MemorySpace.SMEM),  # seed scalar
            pl.BlockSpec(memory_space=pltpu.MemorySpace.VMEM),  # parameter0 (5,5)
        ],
        out_specs=pl.BlockSpec(memory_space=pltpu.MemorySpace.VMEM),
        cost_estimate=pl.CostEstimate(flops=25, transcendentals=0, bytes_accessed=300),
    )(seed_arr, parameter0)

    # Free metadata reshape back to the PyTorch output shape (1, 5, 5).
    return out2d.reshape(x1.shape)


if __name__ == "__main__":
    key = jax.random.PRNGKey(0)
    k_x, k_p = jax.random.split(key)

    # Shapes implied by the module: x1 -> (1, 5, 5), parameter0 -> (5, 5)
    x1 = jax.random.normal(k_x, (1, 5, 5), dtype=jnp.float32)
    parameter0 = jax.random.normal(k_p, (5, 5), dtype=jnp.float32)

    out = module0_forward(x1, parameter0, seed=1234)
    out = jax.block_until_ready(out)

    # Sanity: output = parameter0 + noise with noise ~ U[0,1)
    noise = out - parameter0[None, :, :]
    assert out.shape == (1, 5, 5)
    assert bool(jnp.all(noise > -1e-6)) and bool(jnp.all(noise < 1.0 + 1e-6))
    assert float(jnp.std(noise)) > 0.0  # the PRNG actually produced varying values

    print("KERNEL_OK")
</pallas_src>

<mosaic_0001>
module attributes {stable_mosaic.version = 11 : i64} {
  func.func @_module0_kernel(%arg0: memref<1xi32, #tpu.memory_space<smem>>, %arg1: memref<5x5xf32, #tpu.memory_space<vmem>>, %arg2: memref<5x5xf32, #tpu.memory_space<vmem>>) attributes {dimension_semantics = [], scalar_prefetch = 0 : i64, scratch_operands = 0 : i64, tpu.core_type = #tpu.core_type<tc>} {
    %0 = tpu.iota {dimensions = array<i32: 0>} : vector<8x128xi32>
    %1 = tpu.iota {dimensions = array<i32: 1>} : vector<8x128xi32>
    %c7_i32 = arith.constant 7 : i32
    %2 = vector.broadcast %c7_i32 : i32 to vector<8x128xi32>
    %3 = arith.shli %0, %2 : vector<8x128xi32>
    %4 = arith.ori %3, %1 : vector<8x128xi32>
    %c0 = arith.constant 0 : index
    %5 = memref.load %arg0[%c0] : memref<1xi32, #tpu.memory_space<smem>>
    %c-1640531527_i32 = arith.constant -1640531527 : i32
    %6 = arith.muli %5, %c-1640531527_i32 : i32
    %7 = vector.broadcast %6 : i32 to vector<8x128xi32>
    %8 = arith.xori %4, %7 : vector<8x128xi32>
    %9 = tpu.bitcast %8 : vector<8x128xi32> -> vector<8x128xi32>
    %c16_i32 = arith.constant 16 : i32
    %10 = vector.broadcast %c16_i32 : i32 to vector<8x128xi32>
    %11 = arith.shrui %9, %10 : vector<8x128xi32>
    %12 = arith.xori %9, %11 : vector<8x128xi32>
    %c-2048144789_i32 = arith.constant -2048144789 : i32
    %13 = vector.broadcast %c-2048144789_i32 : i32 to vector<8x128xi32>
    %14 = arith.muli %12, %13 : vector<8x128xi32>
    %c13_i32 = arith.constant 13 : i32
    %15 = vector.broadcast %c13_i32 : i32 to vector<8x128xi32>
    %16 = arith.shrui %14, %15 : vector<8x128xi32>
    %17 = arith.xori %14, %16 : vector<8x128xi32>
    %c-1028477387_i32 = arith.constant -1028477387 : i32
    %18 = vector.broadcast %c-1028477387_i32 : i32 to vector<8x128xi32>
    %19 = arith.muli %17, %18 : vector<8x128xi32>
    %c16_i32_0 = arith.constant 16 : i32
    %20 = vector.broadcast %c16_i32_0 : i32 to vector<8x128xi32>
    %21 = arith.shrui %19, %20 : vector<8x128xi32>
    %22 = arith.xori %19, %21 : vector<8x128xi32>
    %23 = vector.extract_strided_slice %22 {offsets = [0, 0], sizes = [5, 5], strides = [1, 1]} : vector<8x128xi32> to vector<5x5xi32>
    %c8388607_i32 = arith.constant 8388607 : i32
    %24 = vector.broadcast %c8388607_i32 : i32 to vector<5x5xi32>
    %25 = arith.andi %23, %24 : vector<5x5xi32>
    %c1065353216_i32 = arith.constant 1065353216 : i32
    %26 = vector.broadcast %c1065353216_i32 : i32 to vector<5x5xi32>
    %27 = arith.ori %25, %26 : vector<5x5xi32>
    %28 = tpu.bitcast %27 : vector<5x5xi32> -> vector<5x5xf32>
    %cst = arith.constant 1.000000e+00 : f32
    %29 = vector.broadcast %cst : f32 to vector<5x5xf32>
    %30 = arith.subf %28, %29 : vector<5x5xf32>
    %c0_1 = arith.constant 0 : index
    %c0_2 = arith.constant 0 : index
    %31 = vector.load %arg1[%c0_1, %c0_2] : memref<5x5xf32, #tpu.memory_space<vmem>>, vector<5x5xf32>
    %32 = arith.addf %31, %30 : vector<5x5xf32>
    %c0_3 = arith.constant 0 : index
    %c0_4 = arith.constant 0 : index
    %33 = vector.load %arg2[%c0_3, %c0_4] : memref<5x5xf32, #tpu.memory_space<vmem>>, vector<5x5xf32>
    tpu.vector_store %arg2[%c0_3, %c0_4], %32 {strides = array<i32>} : memref<5x5xf32, #tpu.memory_space<vmem>>, vector<5x5xf32>,
    return
  }
}

</mosaic_0001>

<llo_original>
// kernel: tpu_custom_call.1
$region0: #{tpu_custom_call.1}
  #allocation0 [shape = 'u32[]', space=smem, size = 0x4, offset = 0x4, fixed_abs, tag = 'smem constant byte address 0x4 - core index']
  #allocation1 [shape = 'u32[144,128]{1,0:T(1,128)}', space=vmem, size = 0x12000, scoped, tag = 'internal scratch']
  #allocation2 [shape = 's32[1]{0:T(128)S(6)}', space=smem, size = 0x200, scoped, tag = 'scoped memory for tpu_custom_call.1']
  %s0 = inlined_call_operand.<no memory space> [shape: s32[1], index: 0, kind: input, shape index: {}]
  %s1 = inlined_call_operand.hbm [shape: f32[5,5], index: 1, kind: input, shape index: {}]
  %s2 = inlined_call_operand.hbm [shape: f32[5,5], index: 2, kind: output, shape index: {}]
  %s3 = sld [smem:[#allocation0]]
  $region22: #{tpu_custom_call.1} parent=0
    _
  %s5 = ssub.s32 1, %s3
  %s6 = scalar_select 0, %s5, %s3
  %7 = sst [smem:[#allocation2]] %s0
  $region1: #{tpu_custom_call.1} parent=0
    #allocation3 [shape = 'u8[4096]{0}', space=vmem, size = 0x1000, scoped, tag = 'input window, operand 1, single buffered']
    #allocation4 [shape = 's32[1]{0}', space=sflag, size = 0x4, scoped, tag = 'scoped memory for tpu_custom_call.1']
    #allocation5 [shape = 's32[1]{0}', space=sflag, size = 0x4, scoped, tag = 'scoped memory for tpu_custom_call.1']
    #allocation6 [shape = 'u8[4096]{0}', space=vmem, size = 0x1000, scoped, tag = 'output window, operand 0, single buffered']
    %8 = vsyncpa [#allocation4], 0
    %9 = vsyncpa [#allocation5], 0
    // Predicated region
    $region2: #{tpu_custom_call.1} parent=1 // pred_check
      _
    $region3: #{tpu_custom_call.1} parent=1 // pred_check_branch
      %11 = sbr.rel (0) target = $region5
    $region4: #{tpu_custom_call.1} parent=1 // pred_region
      _
    $region5: #{tpu_custom_call.1} parent=1 // pred_fallthru
      _
    // Predicated region
    $region6: #{tpu_custom_call.1} parent=1 // pred_check
      _
    $region7: #{tpu_custom_call.1} parent=1 // pred_check_branch
      %13 = sbr.rel (0) target = $region9
    $region8: #{tpu_custom_call.1} parent=1 // pred_region
      %s15 = ssub.s32 128, 128
      %16 = vsyncadd [#allocation4], %s15
      %s18 = sshll.u32 [#allocation3], 4
      %s19 = int_to_ptr.vmem [resolvable:$true] %s18
      %21 = dma.hbm_to_vmem [thread:$0]  %s1, 128, %s19, [#allocation4]
    $region9: #{tpu_custom_call.1} parent=1 // pred_fallthru
      _
    // Predicated region
    $region10: #{tpu_custom_call.1} parent=1 // pred_check
      _
    $region11: #{tpu_custom_call.1} parent=1 // pred_check_branch
      %23 = sbr.rel (0) target = $region13
    $region12: #{tpu_custom_call.1} parent=1 // pred_region
      %24 = dma.done [#allocation4], 128
    $region13: #{tpu_custom_call.1} parent=1 // pred_fallthru
      _
    %v25 = vlaneseq
    %v26 = vshrl.u32 %v25, 7
    %v27 = vlaneseq
    %v28 = vand.u32 %v27, 127
    %v29 = vshll.u32 %v26, 7
    %v30 = vor.u32 %v29, %v28
    %s31 = sld [smem:[#allocation2]]
    %s32 = smul.u32 %s31, 2654435769
    %v33 = vstv %s32
    %v34 = vxor.u32 %v30, %v33
    %v35 = vshrl.u32 %v34, 16
    %v36 = vxor.u32 %v34, %v35
    %v37 = vmul.u32 %v36, 2246822507
    %v38 = vshrl.u32 %v37, 13
    %v39 = vxor.u32 %v37, %v38
    %v40 = vmul.u32 %v39, 3266489909
    %v41 = vshrl.u32 %v40, 16
    %v42 = vxor.u32 %v40, %v41
    %v43 = vand.u32 %v42, 8388607
    %v44 = vor.u32 %v43, 1065353216
    %v46 = vsub.f32 %v44, 1.0
    %v47 = vld [vmem:[#allocation3] sm:$0x1f]
    %v48 = vadd.f32 %v47, %v46
    %vm49 = vcmask 36864
    %50 = vst.msk [vmem:[#allocation6] sm:$0x1f] %vm49, %v48
    // Predicated region
    $region14: #{tpu_custom_call.1} parent=1 // pred_check
      _
    $region15: #{tpu_custom_call.1} parent=1 // pred_check_branch
      %52 = sbr.rel (0) target = $region17
    $region16: #{tpu_custom_call.1} parent=1 // pred_region
      %s54 = ssub.s32 128, 128
      %55 = vsyncadd [#allocation5], %s54
      %s57 = sshll.u32 [#allocation6], 4
      %s58 = int_to_ptr.vmem [resolvable:$true] %s57
      %60 = dma.vmem_to_hbm [thread:$0]  %s58, 128, %s2, [#allocation5]
    $region17: #{tpu_custom_call.1} parent=1 // pred_fallthru
      _
    // Predicated region
    $region18: #{tpu_custom_call.1} parent=1 // pred_check
      _
    $region19: #{tpu_custom_call.1} parent=1 // pred_check_branch
      %62 = sbr.rel (0) target = $region21
    $region20: #{tpu_custom_call.1} parent=1 // pred_region
      %63 = dma.done [#allocation5], 128
    $region21: #{tpu_custom_call.1} parent=1 // pred_fallthru
      _
    %64 = vsyncpa [#allocation4], 1
    %65 = vsyncpa [#allocation5], 1

</llo_original>
